<compile_context>
chip_gen: v5e
topology: v5e:2x2
jax: 0.10.0
libtpu: 0.0.40
codegen_flags: <defaults>
</compile_context>

<pallas_src>
import functools

import jax
import jax.numpy as jnp
from jax.experimental import pallas as pl
from jax.experimental.pallas import tpu as pltpu


def _identity_kernel(x_ref, o_ref):
    # Elementwise pass-through on the current VMEM tile.
    o_ref[...] = x_ref[...]


def _sublane_multiple(dtype) -> int:
    # Native sublane packing: f32 -> 8, bf16/f16 -> 16, int8/fp8 -> 32.
    itemsize = jnp.dtype(dtype).itemsize
    return max(32 // max(itemsize, 1), 8)


def _vmem_capacity_bytes() -> int:
    try:
        info = pltpu.get_tpu_info()
        return int(getattr(info, "vmem_capacity_bytes", 64 * 1024 * 1024))
    except Exception:
        return 64 * 1024 * 1024


def _plan_flatten(shape, sublane):
    """Pick (rows, lanes, padded_total) for a lane- and sublane-dense slab."""
    total = 1
    for d in shape:
        total *= int(d)
    w = int(shape[-1]) if len(shape) else 1
    # Prefer keeping the original minor dim when it is already lane-dense:
    # the reshape is then a pure bitcast of the (8,128)-tiled layout.
    if w % 128 == 0 and (total // w) % sublane == 0:
        return total // w, w, total
    # Otherwise pick a lane width (multiple of 128) that keeps rows a
    # multiple of the sublane packing, so vregs stay fully dense.
    for lanes in (1024, 512, 256, 128):
        if total % lanes == 0 and (total // lanes) % sublane == 0:
            return total // lanes, lanes, total
    # Fallback: pad the flattened length up to a multiple of sublane*128 so
    # both axes stay dense (no masked partial stores); pad is < 1 tile.
    lanes = 128
    chunk = sublane * lanes
    padded = ((total + chunk - 1) // chunk) * chunk
    return padded // lanes, lanes, padded


def _pallas_identity_copy(x: jax.Array) -> jax.Array:
    """Debug-only pipelined identity copy through VMEM."""
    orig_shape = x.shape
    dtype = x.dtype
    itemsize = jnp.dtype(dtype).itemsize
    sublane = _sublane_multiple(dtype)

    total = 1
    for d in orig_shape:
        total *= int(d)
    rows, lanes, padded_total = _plan_flatten(orig_shape, sublane)

    flat = x.reshape(-1)
    if padded_total != total:
        flat = jnp.pad(flat, (0, padded_total - total))
    x2d = flat.reshape(rows, lanes)

    row_bytes = lanes * itemsize

    # ~1 MiB tiles: the copy is purely HBM-bound and saturates bandwidth well
    # below this; small tiles keep the 2-in + 2-out double buffers tiny,
    # shorten pipeline fill, and leave many grid steps for the 2-TC split.
    max_tile_bytes = 1 << 20
    max_tile_rows = max(max_tile_bytes // row_bytes, sublane)
    # Aim for >= 8 grid steps when the tensor is big enough so the
    # "parallel" axis can shard across TensorCores and DMAs pipeline.
    target_rows = max(pl.cdiv(rows, 8), sublane)
    tile_r = min(max_tile_rows, target_rows, rows)
    tile_r = max((tile_r // sublane) * sublane, sublane)
    if tile_r > rows:
        tile_r = rows

    grid = (pl.cdiv(rows, tile_r),)

    # Modest scoped VMEM: 4 x ~1 MiB buffers need far less than this; keep
    # headroom under v7x's 64 MiB physical VMEM for Mosaic scratch.
    vmem_limit = min(_vmem_capacity_bytes() // 2, 32 * 1024 * 1024)

    out2d = pl.pallas_call(
        _identity_kernel,
        out_shape=jax.ShapeDtypeStruct((rows, lanes), dtype),
        grid=grid,
        in_specs=[pl.BlockSpec((tile_r, lanes), lambda i: (i, 0))],
        out_specs=pl.BlockSpec((tile_r, lanes), lambda i: (i, 0)),
        compiler_params=pltpu.CompilerParams(
            dimension_semantics=("parallel",),
            vmem_limit_bytes=vmem_limit,
        ),
        cost_estimate=pl.CostEstimate(
            flops=0,
            transcendentals=0,
            bytes_accessed=2 * rows * lanes * itemsize,
        ),
    )(x2d)

    out_flat = out2d.reshape(-1)
    if padded_total != total:
        out_flat = out_flat[:total]
    return out_flat.reshape(orig_shape)


def base_model_forward(x: jax.Array, *, use_pallas_copy: bool = False) -> jax.Array:
    """Pass-through 'forward' for the abstract BaseModel.

    Production path is a literal no-op (`return x`): the module has no
    compute, so no kernel (and no HBM traffic) is the optimal implementation.
    `use_pallas_copy=True` runs the pipelined Pallas identity copy instead
    (debug / demonstration only).
    """
    if not use_pallas_copy:
        return x
    return _pallas_identity_copy(x)


if __name__ == "__main__":
    key = jax.random.PRNGKey(0)
    # Small NCHW input consistent with a typical vision-style model input.
    x = jax.random.normal(key, (2, 4, 16, 16), dtype=jnp.float32)

    # Production path: zero-cost pass-through.
    y_fast = base_model_forward(x)
    assert y_fast is x

    # Debug path: Pallas identity copy, run under jit so the flatten /
    # unflatten reshapes fuse with the custom call.
    fwd = jax.jit(functools.partial(base_model_forward, use_pallas_copy=True))
    y = fwd(x)
    jax.block_until_ready(y)

    assert y.shape == x.shape and y.dtype == x.dtype
    assert bool(jnp.array_equal(y, x))
    print("KERNEL_OK")
</pallas_src>

<mosaic_0001>
module attributes {stable_mosaic.version = 11 : i64} {
  func.func @_identity_kernel(%arg0: i32, %arg1: memref<8x256xf32, #tpu.memory_space<vmem>>, %arg2: memref<8x256xf32, #tpu.memory_space<vmem>>) attributes {dimension_semantics = [#tpu.dimension_semantics<parallel>], iteration_bounds = array<i64: 1>, scalar_prefetch = 0 : i64, scratch_operands = 0 : i64, tpu.core_type = #tpu.core_type<tc>, window_params = [{transform_indices = @transform_0, window_bounds = array<i64: 8, 256>}, {transform_indices = @transform_1, window_bounds = array<i64: 8, 256>}]} {
    %c0 = arith.constant 0 : index
    %c0_0 = arith.constant 0 : index
    %0 = vector.load %arg1[%c0, %c0_0] : memref<8x256xf32, #tpu.memory_space<vmem>>, vector<8x256xf32>
    %c0_1 = arith.constant 0 : index
    %c0_2 = arith.constant 0 : index
    %1 = vector.load %arg2[%c0_1, %c0_2] : memref<8x256xf32, #tpu.memory_space<vmem>>, vector<8x256xf32>
    tpu.vector_store %arg2[%c0_1, %c0_2], %0 {strides = array<i32>} : memref<8x256xf32, #tpu.memory_space<vmem>>, vector<8x256xf32>,
    return
  }
  func.func @transform_0(%arg0: i32) -> (i32, i32) {
    %c0_i32 = arith.constant 0 : i32
    %c0_i32_0 = arith.constant 0 : i32
    return %arg0, %c0_i32 : i32, i32
  }
  func.func @transform_1(%arg0: i32) -> (i32, i32) {
    %c0_i32 = arith.constant 0 : i32
    %c0_i32_0 = arith.constant 0 : i32
    return %arg0, %c0_i32 : i32, i32
  }
}

</mosaic_0001>

<llo_original>
// kernel: base_model_forward.1
$region0: #{base_model_forward.1}
  #allocation0 [shape = 'u32[]', space=smem, size = 0x4, offset = 0x4, fixed_abs, tag = 'smem constant byte address 0x4 - core index']
  #allocation1 [shape = 'u32[72,128]{1,0:T(1,128)}', space=vmem, size = 0x9000, scoped, tag = 'internal scratch']
  %s0 = inlined_call_operand.vmem [shape: f32[8,256], index: 0, kind: input, shape index: {}]
  %s1 = inlined_call_operand.vmem [shape: f32[8,256], index: 1, kind: output, shape index: {}]
  %s2 = sld [smem:[#allocation0]]
  $region14: #{base_model_forward.1} parent=0
    _
  %s4 = ssub.s32 1, %s2
  %s5 = scalar_select 0, %s4, %s2
  // Predicated region
  $region2: #{base_model_forward.1} parent=0 // pred_check
    _
  $region3: #{base_model_forward.1} parent=0 // pred_check_branch
    %7 = sbr.rel (0) target = $region5
  $region4: #{base_model_forward.1} parent=0 // pred_region
    _
  $region5: #{base_model_forward.1} parent=0 // pred_fallthru
    _
  %v8 = vld [vmem:[%s0] sm:$0xff]
  %v9 = vld [vmem:[%s0 + $0x8] sm:$0xff]
  %10 = vst [vmem:[%s1] sm:$0xff] %v8
  %11 = vst [vmem:[%s1 + $0x8] sm:$0xff] %v9
  // Predicated region
  $region6: #{base_model_forward.1} parent=0 // pred_check
    _
  $region7: #{base_model_forward.1} parent=0 // pred_check_branch
    %13 = sbr.rel (0) target = $region9
  $region8: #{base_model_forward.1} parent=0 // pred_region
    _
  $region9: #{base_model_forward.1} parent=0 // pred_fallthru
    _
  // Predicated region
  $region10: #{base_model_forward.1} parent=0 // pred_check
    _
  $region11: #{base_model_forward.1} parent=0 // pred_check_branch
    %15 = sbr.rel (0) target = $region13
  $region12: #{base_model_forward.1} parent=0 // pred_region
    _
  $region13: #{base_model_forward.1} parent=0 // pred_fallthru
    _

</llo_original>
